<compile_context>
chip_gen: v6e
topology: v6e:2x2x1
jax: 0.10.0
libtpu: 0.0.40
codegen_flags: <defaults>
</compile_context>

<pallas_src>
import functools

import jax
import jax.numpy as jnp
from jax.experimental import pallas as pl
from jax.experimental.pallas import tpu as pltpu


_LANE = 128                       # lane quantum: block last dim is a multiple of this
_TARGET_TILE_BYTES = 2 * 1024 * 1024   # ~2 MiB per depth input buffer (per review)
_NUM_CORES = 2                    # v7x megacore split; serial (cheap) on v5e/v6e
_SUB = 8                          # sublane rows per output block (keeps (8,128) rule)


def _round_up(x, m):
    return ((x + m - 1) // m) * m


def _terrain_depth_loss_kernel(logits_ref, labels_ref, dp_ref, dt_ref,
                               out_ref, acc_ref, *, hw, tile_c, spc):
    c = pl.program_id(0)          # "core" axis (parallel)
    j = pl.program_id(1)          # column-block axis (reduction, last/inner)

    @pl.when(j == 0)
    def _init():
        acc_ref[...] = jnp.zeros_like(acc_ref)

    # Logical start column of this block (may overrun hw; index_map clamps the
    # actual DMA, we mask by the *logical* position).
    col0 = (c * spc + j) * tile_c

    def _accumulate(masked):
        d = jnp.abs(dp_ref[...].astype(jnp.float32)
                    - dt_ref[...].astype(jnp.float32))
        if masked:
            col = col0 + jax.lax.broadcasted_iota(jnp.int32, d.shape, 1)
            d = jnp.where(col < hw, d, 0.0)
        # Per-tile reduce (VPU tree + one XLU cross-lane reduce), hidden under DMA.
        acc_ref[...] += jnp.sum(d, axis=(0, 1), keepdims=True)

    @pl.when(col0 + tile_c <= hw)         # steady state: full in-bounds block
    def _steady():
        _accumulate(masked=False)

    @pl.when(col0 + tile_c > hw)          # ragged tail / grid-overrun block
    def _tail():
        _accumulate(masked=True)

    @pl.when(j == pl.num_programs(1) - 1)
    def _finalize():
        dsum = acc_ref[...]                                   # (1, 1) per-core L1 sum

        # ---- terrain CE: logits stay VMEM-resident, computed exactly once ----
        # TODO(synk): nn.CrossEntropyLoss ignore_index=-100 not handled
        # (labels assumed in [0, C)).
        logits = logits_ref[...].astype(jnp.float32)          # (B, C)
        Bn, Cn = logits.shape
        m = jnp.max(logits, axis=-1, keepdims=True)
        lse = jnp.log(jnp.sum(jnp.exp(logits - m), axis=-1, keepdims=True)) + m
        colc = jax.lax.broadcasted_iota(jnp.int32, (Bn, Cn), 1)
        label_logit = jnp.sum(jnp.where(colc == labels_ref[...], logits, 0.0),
                              axis=-1, keepdims=True)         # (B, 1)
        tsum = jnp.sum(lse - label_logit, axis=(0, 1), keepdims=True)   # (1, 1)
        tsum = jnp.where(c == 0, tsum, jnp.zeros_like(tsum))  # only core 0 reports CE

        # Pack [depth_sum, ce_sum, 0, ...] into this core's lane-dense (8,128) block.
        sub = jax.lax.broadcasted_iota(jnp.int32, (_SUB, _LANE), 0)
        lane = jax.lax.broadcasted_iota(jnp.int32, (_SUB, _LANE), 1)
        row0 = sub == 0
        out_ref[...] = jnp.where(row0 & (lane == 0), dsum,
                       jnp.where(row0 & (lane == 1), tsum, 0.0))


def terrain_depth_loss(terrain_pred, terrain_target, depth_pred, depth_target,
                       terrain_weight=1.0, depth_weight=1.0):
    """Pallas implementation of TerrainDepthLoss.forward.

    Args:
      terrain_pred:   (B, C) float logits (any float dtype)
      terrain_target: (B,)   int class labels
      depth_pred:     (B, 1, H, W) float depth map (NCHW)
      depth_target:   (B, H, W)    float depth ground truth
    Returns:
      (total_loss, terrain_loss, depth_loss) float32 scalars
    """
    B, C = terrain_pred.shape
    labels = terrain_target.astype(jnp.int32).reshape(B, 1)

    # Free metadata-only reshapes (no pad, no HBM copy): (B,1,H,W) -> (B, H*W).
    dp2 = depth_pred.reshape(B, -1)
    dt2 = depth_target.reshape(B, -1)
    hw = dp2.shape[1]
    n_depth = B * hw

    # Tile the column (lane) axis: multiple of 128, ~2 MiB per input buffer.
    itemsize = max(dp2.dtype.itemsize, dt2.dtype.itemsize)
    tile_c_cap = max(_LANE,
                     (_TARGET_TILE_BYTES // max(1, B * itemsize)) // _LANE * _LANE)
    tile_c = min(_round_up(hw, _LANE), tile_c_cap)
    col_blocks = pl.cdiv(hw, tile_c)
    spc = pl.cdiv(col_blocks, _NUM_CORES)       # column blocks per core

    kernel = functools.partial(_terrain_depth_loss_kernel,
                               hw=int(hw), tile_c=int(tile_c), spc=int(spc))

    def depth_map(ci, ji):
        # Clamp so overrun blocks (core imbalance) stay in-bounds; the kernel
        # masks them out by logical column position.
        return (0, jnp.minimum(ci * spc + ji, col_blocks - 1))

    grid_spec = pltpu.PrefetchScalarGridSpec(
        num_scalar_prefetch=0,
        grid=(_NUM_CORES, spc),
        in_specs=[
            pl.BlockSpec((B, C), lambda ci, ji: (0, 0)),    # logits: resident
            pl.BlockSpec((B, 1), lambda ci, ji: (0, 0)),    # labels: resident
            pl.BlockSpec((B, tile_c), depth_map),           # depth pred tiles
            pl.BlockSpec((B, tile_c), depth_map),           # depth target tiles
        ],
        out_specs=pl.BlockSpec((_SUB, _LANE), lambda ci, ji: (ci, 0)),
        scratch_shapes=[pltpu.VMEM((1, 1), jnp.float32)],   # tiny per-core accumulator
    )

    depth_bytes = n_depth * (dp2.dtype.itemsize + dt2.dtype.itemsize)
    cost = pl.CostEstimate(
        flops=int(4 * n_depth + 10 * B * C),
        transcendentals=int(B * C + B),
        bytes_accessed=int(depth_bytes + B * C * terrain_pred.dtype.itemsize
                           + B * 4 + _NUM_CORES * _SUB * _LANE * 4),
    )

    out = pl.pallas_call(
        kernel,
        out_shape=jax.ShapeDtypeStruct((_NUM_CORES * _SUB, _LANE), jnp.float32),
        grid_spec=grid_spec,
        compiler_params=pltpu.CompilerParams(
            dimension_semantics=("parallel", "arbitrary"),
            # 2 inputs x 2 buffers x ~2 MiB + residents ~ 9 MiB; explicit limit is
            # safe on v5e (16 MiB default scoped) and v6e/v7x (32 MiB default).
            vmem_limit_bytes=32 * 1024 * 1024),
        cost_estimate=cost,
    )(terrain_pred, labels, dp2, dt2)

    # Combine per-core partial sums + normalize (trivial scalar work in wrapper).
    dsum = jnp.sum(out[::_SUB, 0])
    tsum = out[0, 1]
    depth_loss = dsum / jnp.float32(n_depth)
    terrain_loss = tsum / jnp.float32(B)
    total = (jnp.float32(terrain_weight) * terrain_loss
             + jnp.float32(depth_weight) * depth_loss)
    return total, terrain_loss, depth_loss


def _reference(terrain_pred, terrain_target, depth_pred, depth_target, tw=1.0, dw=1.0):
    logp = jax.nn.log_softmax(terrain_pred.astype(jnp.float32), axis=-1)
    tloss = -jnp.mean(jnp.take_along_axis(logp, terrain_target[:, None], axis=-1))
    dloss = jnp.mean(jnp.abs(jnp.squeeze(depth_pred, 1).astype(jnp.float32)
                             - depth_target.astype(jnp.float32)))
    return tw * tloss + dw * dloss, tloss, dloss


if __name__ == "__main__":
    key = jax.random.PRNGKey(0)
    k1, k2, k3, k4 = jax.random.split(key, 4)

    B, C, H, W = 2, 4, 16, 16
    terrain_pred = jax.random.normal(k1, (B, C), dtype=jnp.float32)
    terrain_target = jax.random.randint(k2, (B,), 0, C, dtype=jnp.int32)
    depth_pred = jax.random.normal(k3, (B, 1, H, W), dtype=jnp.float32)
    depth_target = jax.random.normal(k4, (B, H, W), dtype=jnp.float32)

    total, tloss, dloss = terrain_depth_loss(
        terrain_pred, terrain_target, depth_pred, depth_target,
        terrain_weight=1.0, depth_weight=1.0)
    jax.block_until_ready((total, tloss, dloss))

    # sanity-check against a pure-JAX reference
    ref_total, ref_t, ref_d = _reference(terrain_pred, terrain_target,
                                         depth_pred, depth_target)
    assert jnp.allclose(total, ref_total, rtol=1e-5, atol=1e-5)
    assert jnp.allclose(tloss, ref_t, rtol=1e-5, atol=1e-5)
    assert jnp.allclose(dloss, ref_d, rtol=1e-5, atol=1e-5)

    print("KERNEL_OK")
</pallas_src>

<mosaic_0001>
module attributes {stable_mosaic.version = 11 : i64} {
  func.func @_terrain_depth_loss_kernel(%arg0: i32, %arg1: i32, %arg2: memref<2x4xf32, #tpu.memory_space<vmem>>, %arg3: memref<2x1xi32, #tpu.memory_space<vmem>>, %arg4: memref<2x256xf32, #tpu.memory_space<vmem>>, %arg5: memref<2x256xf32, #tpu.memory_space<vmem>>, %arg6: memref<8x128xf32, #tpu.memory_space<vmem>>, %arg7: memref<1x1xf32, #tpu.memory_space<vmem>>) attributes {dimension_semantics = [#tpu.dimension_semantics<parallel>, #tpu.dimension_semantics<arbitrary>], iteration_bounds = array<i64: 2, 1>, scalar_prefetch = 0 : i64, scratch_operands = 1 : i64, tpu.core_type = #tpu.core_type<tc>, window_params = [{pipeline_mode = #tpu.pipeline_mode<synchronous>, transform_indices = @transform_0, window_bounds = array<i64: 2, 4>}, {pipeline_mode = #tpu.pipeline_mode<synchronous>, transform_indices = @transform_1, window_bounds = array<i64: 2, 1>}, {transform_indices = @transform_2, window_bounds = array<i64: 2, 256>}, {transform_indices = @transform_3, window_bounds = array<i64: 2, 256>}, {transform_indices = @transform_4, window_bounds = array<i64: 8, 128>}]} {
    %c0_i32 = arith.constant 0 : i32
    %0 = arith.cmpi eq, %arg1, %c0_i32 : i32
    %1 = arith.extui %0 : i1 to i32
    %c0_i32_0 = arith.constant 0 : i32
    %2 = arith.cmpi ne, %1, %c0_i32_0 : i32
    scf.if %2 {
      %cst = arith.constant 0.000000e+00 : f32
      %17 = vector.broadcast %cst : f32 to vector<1x1xf32>
      %c0 = arith.constant 0 : index
      %c0_9 = arith.constant 0 : index
      %18 = vector.load %arg7[%c0, %c0_9] : memref<1x1xf32, #tpu.memory_space<vmem>>, vector<1x1xf32>
      tpu.vector_store %arg7[%c0, %c0_9], %17 {strides = array<i32>} : memref<1x1xf32, #tpu.memory_space<vmem>>, vector<1x1xf32>,
    } else {
    }
    %c1_i32 = arith.constant 1 : i32
    %3 = arith.muli %arg0, %c1_i32 : i32
    %4 = arith.addi %3, %arg1 : i32
    %c256_i32 = arith.constant 256 : i32
    %5 = arith.muli %4, %c256_i32 : i32
    %c256_i32_1 = arith.constant 256 : i32
    %6 = arith.addi %5, %c256_i32_1 : i32
    %c256_i32_2 = arith.constant 256 : i32
    %7 = arith.cmpi sle, %6, %c256_i32_2 : i32
    %8 = arith.extui %7 : i1 to i32
    %c0_i32_3 = arith.constant 0 : i32
    %9 = arith.cmpi ne, %8, %c0_i32_3 : i32
    scf.if %9 {
      %c0 = arith.constant 0 : index
      %c0_9 = arith.constant 0 : index
      %17 = vector.load %arg4[%c0, %c0_9] : memref<2x256xf32, #tpu.memory_space<vmem>>, vector<2x256xf32>
      %c0_10 = arith.constant 0 : index
      %c0_11 = arith.constant 0 : index
      %18 = vector.load %arg5[%c0_10, %c0_11] : memref<2x256xf32, #tpu.memory_space<vmem>>, vector<2x256xf32>
      %19 = arith.subf %17, %18 : vector<2x256xf32>
      %20 = math.absf %19 : vector<2x256xf32>
      %c0_12 = arith.constant 0 : index
      %c0_13 = arith.constant 0 : index
      %21 = vector.load %arg7[%c0_12, %c0_13] : memref<1x1xf32, #tpu.memory_space<vmem>>, vector<1x1xf32>
      %22 = vector.shape_cast %20 : vector<2x256xf32> to vector<1x2x256xf32>
      %cst = arith.constant dense<0.000000e+00> : vector<1xf32>
      %23 = vector.multi_reduction <add>, %22, %cst [1, 2] : vector<1x2x256xf32> to vector<1xf32>
      %24 = vector.shape_cast %23 : vector<1xf32> to vector<1x1x1xf32>
      %25 = vector.extract %24[0, 0, 0] : f32 from vector<1x1x1xf32>
      %26 = vector.broadcast %25 : f32 to vector<1x1xf32>
      %27 = arith.addf %21, %26 : vector<1x1xf32>
      %c0_14 = arith.constant 0 : index
      %c0_15 = arith.constant 0 : index
      %28 = vector.load %arg7[%c0_14, %c0_15] : memref<1x1xf32, #tpu.memory_space<vmem>>, vector<1x1xf32>
      tpu.vector_store %arg7[%c0_14, %c0_15], %27 {strides = array<i32>} : memref<1x1xf32, #tpu.memory_space<vmem>>, vector<1x1xf32>,
    } else {
    }
    %c256_i32_4 = arith.constant 256 : i32
    %10 = arith.addi %5, %c256_i32_4 : i32
    %c256_i32_5 = arith.constant 256 : i32
    %11 = arith.cmpi sgt, %10, %c256_i32_5 : i32
    %12 = arith.extui %11 : i1 to i32
    %c0_i32_6 = arith.constant 0 : i32
    %13 = arith.cmpi ne, %12, %c0_i32_6 : i32
    scf.if %13 {
      %c0 = arith.constant 0 : index
      %c0_9 = arith.constant 0 : index
      %17 = vector.load %arg4[%c0, %c0_9] : memref<2x256xf32, #tpu.memory_space<vmem>>, vector<2x256xf32>
      %c0_10 = arith.constant 0 : index
      %c0_11 = arith.constant 0 : index
      %18 = vector.load %arg5[%c0_10, %c0_11] : memref<2x256xf32, #tpu.memory_space<vmem>>, vector<2x256xf32>
      %19 = arith.subf %17, %18 : vector<2x256xf32>
      %20 = math.absf %19 : vector<2x256xf32>
      %21 = tpu.iota {dimensions = array<i32: 1>} : vector<2x256xi32>
      %22 = vector.broadcast %5 : i32 to vector<2x256xi32>
      %23 = arith.addi %22, %21 : vector<2x256xi32>
      %c256_i32_12 = arith.constant 256 : i32
      %24 = vector.broadcast %c256_i32_12 : i32 to vector<2x256xi32>
      %25 = arith.cmpi slt, %23, %24 : vector<2x256xi32>
      %cst = arith.constant 0.000000e+00 : f32
      %26 = vector.broadcast %cst : f32 to vector<2x256xf32>
      %27 = arith.select %25, %20, %26 : vector<2x256xi1>, vector<2x256xf32>
      %c0_13 = arith.constant 0 : index
      %c0_14 = arith.constant 0 : index
      %28 = vector.load %arg7[%c0_13, %c0_14] : memref<1x1xf32, #tpu.memory_space<vmem>>, vector<1x1xf32>
      %29 = vector.shape_cast %27 : vector<2x256xf32> to vector<1x2x256xf32>
      %cst_15 = arith.constant dense<0.000000e+00> : vector<1xf32>
      %30 = vector.multi_reduction <add>, %29, %cst_15 [1, 2] : vector<1x2x256xf32> to vector<1xf32>
      %31 = vector.shape_cast %30 : vector<1xf32> to vector<1x1x1xf32>
      %32 = vector.extract %31[0, 0, 0] : f32 from vector<1x1x1xf32>
      %33 = vector.broadcast %32 : f32 to vector<1x1xf32>
      %34 = arith.addf %28, %33 : vector<1x1xf32>
      %c0_16 = arith.constant 0 : index
      %c0_17 = arith.constant 0 : index
      %35 = vector.load %arg7[%c0_16, %c0_17] : memref<1x1xf32, #tpu.memory_space<vmem>>, vector<1x1xf32>
      tpu.vector_store %arg7[%c0_16, %c0_17], %34 {strides = array<i32>} : memref<1x1xf32, #tpu.memory_space<vmem>>, vector<1x1xf32>,
    } else {
    }
    %c0_i32_7 = arith.constant 0 : i32
    %14 = arith.cmpi eq, %arg1, %c0_i32_7 : i32
    %15 = arith.extui %14 : i1 to i32
    %c0_i32_8 = arith.constant 0 : i32
    %16 = arith.cmpi ne, %15, %c0_i32_8 : i32
    scf.if %16 {
      %c0 = arith.constant 0 : index
      %c0_9 = arith.constant 0 : index
      %17 = vector.load %arg7[%c0, %c0_9] : memref<1x1xf32, #tpu.memory_space<vmem>>, vector<1x1xf32>
      %c0_10 = arith.constant 0 : index
      %c0_11 = arith.constant 0 : index
      %18 = vector.load %arg2[%c0_10, %c0_11] : memref<2x4xf32, #tpu.memory_space<vmem>>, vector<2x4xf32>
      %cst = arith.constant dense<0xFF800000> : vector<2xf32>
      %19 = vector.multi_reduction <maximumf>, %18, %cst [1] : vector<2x4xf32> to vector<2xf32>
      %20 = vector.shape_cast %19 : vector<2xf32> to vector<2x1xf32>
      %21 = vector.broadcast %20 : vector<2x1xf32> to vector<2x4xf32>
      %22 = arith.subf %18, %21 : vector<2x4xf32>
      %23 = math.exp %22 : vector<2x4xf32>
      %cst_12 = arith.constant dense<0.000000e+00> : vector<2xf32>
      %24 = vector.multi_reduction <add>, %23, %cst_12 [1] : vector<2x4xf32> to vector<2xf32>
      %25 = vector.shape_cast %24 : vector<2xf32> to vector<2x1xf32>
      %26 = math.log %25 : vector<2x1xf32>
      %27 = arith.addf %26, %20 : vector<2x1xf32>
      %28 = tpu.iota {dimensions = array<i32: 1>} : vector<2x4xi32>
      %c0_13 = arith.constant 0 : index
      %c0_14 = arith.constant 0 : index
      %29 = vector.load %arg3[%c0_13, %c0_14] : memref<2x1xi32, #tpu.memory_space<vmem>>, vector<2x1xi32>
      %30 = vector.broadcast %29 : vector<2x1xi32> to vector<2x4xi32>
      %31 = arith.cmpi eq, %28, %30 : vector<2x4xi32>
      %cst_15 = arith.constant 0.000000e+00 : f32
      %32 = vector.broadcast %cst_15 : f32 to vector<2x4xf32>
      %33 = arith.select %31, %18, %32 : vector<2x4xi1>, vector<2x4xf32>
      %cst_16 = arith.constant dense<0.000000e+00> : vector<2xf32>
      %34 = vector.multi_reduction <add>, %33, %cst_16 [1] : vector<2x4xf32> to vector<2xf32>
      %35 = vector.shape_cast %34 : vector<2xf32> to vector<2x1xf32>
      %36 = arith.subf %27, %35 : vector<2x1xf32>
      %37 = vector.shape_cast %36 : vector<2x1xf32> to vector<1x2x1xf32>
      %cst_17 = arith.constant dense<0.000000e+00> : vector<1xf32>
      %38 = vector.multi_reduction <add>, %37, %cst_17 [1, 2] : vector<1x2x1xf32> to vector<1xf32>
      %39 = vector.shape_cast %38 : vector<1xf32> to vector<1x1x1xf32>
      %40 = vector.extract %39[0, 0, 0] : f32 from vector<1x1x1xf32>
      %41 = vector.broadcast %40 : f32 to vector<1x1xf32>
      %c0_i32_18 = arith.constant 0 : i32
      %42 = arith.cmpi eq, %arg0, %c0_i32_18 : i32
      %cst_19 = arith.constant 0.000000e+00 : f32
      %43 = vector.broadcast %cst_19 : f32 to vector<1x1xf32>
      %44 = arith.select %42, %41, %43 : vector<1x1xf32>
      %45 = tpu.iota {dimensions = array<i32: 0>} : vector<8x128xi32>
      %46 = tpu.iota {dimensions = array<i32: 1>} : vector<8x128xi32>
      %c0_i32_20 = arith.constant 0 : i32
      %47 = vector.broadcast %c0_i32_20 : i32 to vector<8x128xi32>
      %48 = arith.cmpi eq, %45, %47 : vector<8x128xi32>
      %c0_i32_21 = arith.constant 0 : i32
      %49 = vector.broadcast %c0_i32_21 : i32 to vector<8x128xi32>
      %50 = arith.cmpi eq, %46, %49 : vector<8x128xi32>
      %51 = arith.andi %48, %50 : vector<8x128xi1>
      %c1_i32_22 = arith.constant 1 : i32
      %52 = vector.broadcast %c1_i32_22 : i32 to vector<8x128xi32>
      %53 = arith.cmpi eq, %46, %52 : vector<8x128xi32>
      %54 = arith.andi %48, %53 : vector<8x128xi1>
      %cst_23 = arith.constant 0.000000e+00 : f32
      %55 = vector.shape_cast %44 : vector<1x1xf32> to vector<1x1xf32>
      %56 = vector.broadcast %55 : vector<1x1xf32> to vector<8x128xf32>
      %57 = vector.broadcast %cst_23 : f32 to vector<8x128xf32>
      %58 = arith.select %54, %56, %57 : vector<8x128xi1>, vector<8x128xf32>
      %59 = vector.shape_cast %17 : vector<1x1xf32> to vector<1x1xf32>
      %60 = vector.broadcast %59 : vector<1x1xf32> to vector<8x128xf32>
      %61 = arith.select %51, %60, %58 : vector<8x128xi1>, vector<8x128xf32>
      %c0_24 = arith.constant 0 : index
      %c0_25 = arith.constant 0 : index
      %62 = vector.load %arg6[%c0_24, %c0_25] : memref<8x128xf32, #tpu.memory_space<vmem>>, vector<8x128xf32>
      tpu.vector_store %arg6[%c0_24, %c0_25], %61 {strides = array<i32>} : memref<8x128xf32, #tpu.memory_space<vmem>>, vector<8x128xf32>,
    } else {
    }
    return
  }
  func.func @transform_0(%arg0: i32, %arg1: i32) -> (i32, i32) {
    %c0_i32 = arith.constant 0 : i32
    %c0_i32_0 = arith.constant 0 : i32
    %c0_i32_1 = arith.constant 0 : i32
    return %c0_i32, %c0_i32_0 : i32, i32
  }
  func.func @transform_1(%arg0: i32, %arg1: i32) -> (i32, i32) {
    %c0_i32 = arith.constant 0 : i32
    %c0_i32_0 = arith.constant 0 : i32
    %c0_i32_1 = arith.constant 0 : i32
    return %c0_i32, %c0_i32_0 : i32, i32
  }
  func.func @transform_2(%arg0: i32, %arg1: i32) -> (i32, i32) {
    %c1_i32 = arith.constant 1 : i32
    %0 = arith.muli %arg0, %c1_i32 : i32
    %1 = arith.addi %0, %arg1 : i32
    %c0_i32 = arith.constant 0 : i32
    %2 = arith.minsi %1, %c0_i32 : i32
    %c0_i32_0 = arith.constant 0 : i32
    %c0_i32_1 = arith.constant 0 : i32
    return %c0_i32_0, %2 : i32, i32
  }
  func.func @transform_3(%arg0: i32, %arg1: i32) -> (i32, i32) {
    %c1_i32 = arith.constant 1 : i32
    %0 = arith.muli %arg0, %c1_i32 : i32
    %1 = arith.addi %0, %arg1 : i32
    %c0_i32 = arith.constant 0 : i32
    %2 = arith.minsi %1, %c0_i32 : i32
    %c0_i32_0 = arith.constant 0 : i32
    %c0_i32_1 = arith.constant 0 : i32
    return %c0_i32_0, %2 : i32, i32
  }
  func.func @transform_4(%arg0: i32, %arg1: i32) -> (i32, i32) {
    %c0_i32 = arith.constant 0 : i32
    %c0_i32_0 = arith.constant 0 : i32
    return %arg0, %c0_i32 : i32, i32
  }
}

</mosaic_0001>

<llo_original>
// kernel: tpu_custom_call.1
$region0: #{tpu_custom_call.1}
  #allocation0 [shape = 'u32[]', space=smem, size = 0x4, offset = 0x4, fixed_abs, tag = 'smem constant byte address 0x4 - core index']
  #allocation1 [shape = 'u32[144,128]{1,0:T(1,128)}', space=vmem, size = 0x12000, scoped, tag = 'internal scratch']
  #allocation2 [shape = 'f32[1,1]{1,0:T(1,128)}', space=vmem, size = 0x200, scoped, tag = 'scratch operand']
  %s0 = inlined_call_operand.hbm [shape: f32[2,4], index: 0, kind: input, shape index: {}]
  %s1 = inlined_call_operand.vmem [shape: s32[2,1], index: 1, kind: input, shape index: {}]
  %s2 = inlined_call_operand.vmem [shape: f32[2,256], index: 2, kind: input, shape index: {}]
  %s3 = inlined_call_operand.vmem [shape: f32[2,256], index: 3, kind: input, shape index: {}]
  %s4 = inlined_call_operand.hbm [shape: f32[16,128], index: 4, kind: output, shape index: {}]
  %s5 = sld [smem:[#allocation0]]
  $region69: #{tpu_custom_call.1} parent=0
    _
  %s7 = ssub.s32 1, %s5
  %s8 = scalar_select 0, %s7, %s5
  $region1: #{tpu_custom_call.1} parent=0
    #allocation3 [shape = 'u8[1024]{0}', space=vmem, size = 0x400, scoped, tag = 'input window, operand 0, single buffered']
    #allocation4 [shape = 's32[2]{0}', space=sflag, size = 0x8, scoped, tag = 'scoped memory for tpu_custom_call.1']
    #allocation5 [shape = 's32[2]{0}', space=sflag, size = 0x8, scoped, tag = 'scoped memory for tpu_custom_call.1']
    #allocation6 [shape = 'u8[8192]{0}', space=vmem, size = 0x2000, scoped, tag = 'output window, operand 0']
    %9 = vsyncpa [#allocation4], 0
    %10 = vsyncpa [#allocation5], 0
    %s11 = scalar_lea.sflag [#allocation5], 1
    %12 = vsyncpa %s11, 0
    loop: start=0, step=1, limit=4
    $region2: #{tpu_custom_call.1} parent=1 // loop_pre_header
      _
    $region3: #{tpu_custom_call.1} parent=1 // loop_header
      %s14 = sphi 0, %s18
      %p15 = scmp.ge.s32.totalorder %s14, 4
      %s21 = sphi 0, %s33
      %s22 = sphi 0, %s29
      %s23 = sphi 0, %s21
      %s24 = sphi 0, %s22
      %s25 = sphi 0, %s23
      %s26 = sphi 0, %s24
      %s34 = sphi 0, %s34
      %s36 = sphi 0, %s34
      %s37 = sphi 0, %s36
      %s51 = sphi 0, %s37
      %s55 = sphi 0, %s55
      %s57 = sphi 0, %s55
      %s58 = sphi 0, %s57
      %s72 = sphi 0, %s58
      %s84 = sphi 0, %s86
      %s87 = sphi 0, %s84
      %s88 = sphi 0, %s87
      %s104 = sphi 0, %s88
      %s116 = sphi 0, %s118
      %s119 = sphi 0, %s116
      %s120 = sphi 0, %s119
      %s136 = sphi 0, %s120
      %s142 = sphi 0, %s144
      %s145 = sphi 0, %s142
      %s146 = sphi 0, %s145
      %s162 = sphi 0, %s146
    $region4: #{tpu_custom_call.1} parent=1 // loop_header_branch
      %17 = sbr.rel (%p15) target = $region8
    $region5: #{tpu_custom_call.1} parent=1 // loop_body
      %s19 = ssub.s32 %s14, 1
      %s20 = ssub.s32 %s14, 2
      %s27 = sadd.s32 1, %s22
      %p28 = scmp.ge.s32.totalorder %s27, 1
      %s29 = scalar_select %p28, 0, %s27
      %s30 = sadd.s32 1, %s21
      %s31 = scalar_select %p28, %s30, %s21
      %p32 = scmp.ge.s32.totalorder %s31, 2
      %s33 = scalar_select %p32, 0, %s31
      %s35 = sadd.s32 %s34, 1
      %p38 = scmp.eq.s32.totalorder %s14, 1
      %p39 = scmp.ne.s32.totalorder %s34, %s36
      %p40 = scmp.eq.s32.totalorder %s14, 0
      %p41 = por %p39, %p40
      %p42 = scmp.ne.s32.totalorder %s34, %s36
      %p43 = scmp.eq.s32.totalorder %s19, 1
      %p44 = por %p42, %p43
      %p45 = scmp.ne.s32.totalorder %s36, %s37
      %p46 = scmp.eq.s32.totalorder %s19, 0
      %p47 = por %p45, %p46
      %p48 = scmp.ne.s32.totalorder %s36, %s37
      %p49 = scmp.eq.s32.totalorder %s20, 1
      %p50 = por %p48, %p49
      %p52 = scmp.ne.s32.totalorder %s37, %s51
      %p53 = scmp.eq.s32.totalorder %s20, 0
      %p54 = por %p52, %p53
      %s56 = sadd.s32 %s55, 1
      %p59 = scmp.eq.s32.totalorder %s14, 1
      %p60 = scmp.ne.s32.totalorder %s55, %s57
      %p61 = scmp.eq.s32.totalorder %s14, 0
      %p62 = por %p60, %p61
      %p63 = scmp.ne.s32.totalorder %s55, %s57
      %p64 = scmp.eq.s32.totalorder %s19, 1
      %p65 = por %p63, %p64
      %p66 = scmp.ne.s32.totalorder %s57, %s58
      %p67 = scmp.eq.s32.totalorder %s19, 0
      %p68 = por %p66, %p67
      %p69 = scmp.ne.s32.totalorder %s57, %s58
      %p70 = scmp.eq.s32.totalorder %s20, 1
      %p71 = por %p69, %p70
      %p73 = scmp.ne.s32.totalorder %s58, %s72
      %p74 = scmp.eq.s32.totalorder %s20, 0
      %p75 = por %p73, %p74
      %s76 = sadd.s32 %s21, %s22
      %p77 = scmp.lt.s32.totalorder %s76, 0
      %s78 = scalar_select %p77, %s76, 0
      %s79 = sadd.s32 %s33, %s29
      %p80 = scmp.lt.s32.totalorder %s79, 0
      %s81 = scalar_select %p80, %s79, 0
      %s82 = ssub.s32 %s78, %s81
      %p83 = scmp.eq.s32.totalorder %s82, 0
      %s85 = sadd.s32 %s84, 1
      %s86 = scalar_select %p83, %s84, %s85
      %p89 = pneg %p83
      %p90 = scmp.eq.s32.totalorder %s14, 1
      %p91 = por %p89, %p90
      %p92 = scmp.ne.s32.totalorder %s84, %s87
      %p93 = scmp.eq.s32.totalorder %s14, 0
      %p94 = por %p92, %p93
      %p95 = scmp.ne.s32.totalorder %s84, %s87
      %p96 = scmp.eq.s32.totalorder %s19, 1
      %p97 = por %p95, %p96
      %p98 = scmp.ne.s32.totalorder %s87, %s88
      %p99 = scmp.eq.s32.totalorder %s19, 0
      %p100 = por %p98, %p99
      %p101 = scmp.ne.s32.totalorder %s87, %s88
      %p102 = scmp.eq.s32.totalorder %s20, 1
      %p103 = por %p101, %p102
      %p105 = scmp.ne.s32.totalorder %s88, %s104
      %p106 = scmp.eq.s32.totalorder %s20, 0
      %p107 = por %p105, %p106
      %s108 = sadd.s32 %s21, %s22
      %p109 = scmp.lt.s32.totalorder %s108, 0
      %s110 = scalar_select %p109, %s108, 0
      %s111 = sadd.s32 %s33, %s29
      %p112 = scmp.lt.s32.totalorder %s111, 0
      %s113 = scalar_select %p112, %s111, 0
      %s114 = ssub.s32 %s110, %s113
      %p115 = scmp.eq.s32.totalorder %s114, 0
      %s117 = sadd.s32 %s116, 1
      %s118 = scalar_select %p115, %s116, %s117
      %p121 = pneg %p115
      %p122 = scmp.eq.s32.totalorder %s14, 1
      %p123 = por %p121, %p122
      %p124 = scmp.ne.s32.totalorder %s116, %s119
      %p125 = scmp.eq.s32.totalorder %s14, 0
      %p126 = por %p124, %p125
      %p127 = scmp.ne.s32.totalorder %s116, %s119
      %p128 = scmp.eq.s32.totalorder %s19, 1
      %p129 = por %p127, %p128
      %p130 = scmp.ne.s32.totalorder %s119, %s120
      %p131 = scmp.eq.s32.totalorder %s19, 0
      %p132 = por %p130, %p131
      %p133 = scmp.ne.s32.totalorder %s119, %s120
      %p134 = scmp.eq.s32.totalorder %s20, 1
      %p135 = por %p133, %p134
      %p137 = scmp.ne.s32.totalorder %s120, %s136
      %p138 = scmp.eq.s32.totalorder %s20, 0
      %p139 = por %p137, %p138
      %s140 = ssub.s32 %s21, %s33
      %p141 = scmp.eq.s32.totalorder %s140, 0
      %s143 = sadd.s32 %s142, 1
      %s144 = scalar_select %p141, %s142, %s143
      %p147 = pneg %p141
      %p148 = scmp.eq.s32.totalorder %s14, 1
      %p149 = por %p147, %p148
      %p150 = scmp.ne.s32.totalorder %s142, %s145
      %p151 = scmp.eq.s32.totalorder %s14, 0
      %p152 = por %p150, %p151
      %p153 = scmp.ne.s32.totalorder %s142, %s145
      %p154 = scmp.eq.s32.totalorder %s19, 1
      %p155 = por %p153, %p154
      %p156 = scmp.ne.s32.totalorder %s145, %s146
      %p157 = scmp.eq.s32.totalorder %s19, 0
      %p158 = por %p156, %p157
      %p159 = scmp.ne.s32.totalorder %s145, %s146
      %p160 = scmp.eq.s32.totalorder %s20, 1
      %p161 = por %p159, %p160
      %p163 = scmp.ne.s32.totalorder %s146, %s162
      %p164 = scmp.eq.s32.totalorder %s20, 0
      %p165 = por %p163, %p164
      %p166 = scmp.le.s32.totalorder 1, %s14
      %p167 = scmp.lt.s32.totalorder %s14, 3
      %p168 = pnand %p166, %p167
      %p169 = pneg %p168
      // Predicated region
      $region9: #{tpu_custom_call.1} parent=5 // pred_check
        _
      $region10: #{tpu_custom_call.1} parent=5 // pred_check_branch
        %171 = sbr.rel (%p168) target = $region12
      $region11: #{tpu_custom_call.1} parent=5 // pred_region
        %s172 = ssub.s32 %s14, 1
        // Predicated region
        $region13: #{tpu_custom_call.1} parent=11 // pred_check
          %p173 = pneg %p47
        $region14: #{tpu_custom_call.1} parent=11 // pred_check_branch
          %175 = sbr.rel (%p173) target = $region16
        $region15: #{tpu_custom_call.1} parent=11 // pred_region
          %s177 = ssub.s32 32, 32
          %178 = vsyncadd [#allocation4], %s177
          %s180 = sshll.u32 [#allocation3], 4
          %s181 = int_to_ptr.vmem [resolvable:$true] %s180
          %183 = dma.hbm_to_vmem [thread:$0]  %s0, 32, %s181, [#allocation4]
        $region16: #{tpu_custom_call.1} parent=11 // pred_fallthru
          _
        // Predicated region
        $region17: #{tpu_custom_call.1} parent=11 // pred_check
          %p184 = pneg %p68
        $region18: #{tpu_custom_call.1} parent=11 // pred_check_branch
          %186 = sbr.rel (%p184) target = $region20
        $region19: #{tpu_custom_call.1} parent=11 // pred_region
          _
        $region20: #{tpu_custom_call.1} parent=11 // pred_fallthru
          _
      $region12: #{tpu_custom_call.1} parent=5 // pred_fallthru
        _
      %p187 = scmp.lt.s32.totalorder %s14, 2
      // Predicated region
      $region21: #{tpu_custom_call.1} parent=5 // pred_check
        %p188 = pneg %p187
      $region22: #{tpu_custom_call.1} parent=5 // pred_check_branch
        %190 = sbr.rel (%p188) target = $region24
      $region23: #{tpu_custom_call.1} parent=5 // pred_region
        // Predicated region
        $region25: #{tpu_custom_call.1} parent=23 // pred_check
          %p191 = pneg %p94
        $region26: #{tpu_custom_call.1} parent=23 // pred_check_branch
          %193 = sbr.rel (%p191) target = $region28
        $region27: #{tpu_custom_call.1} parent=23 // pred_region
          %s194 = sadd.s32 %s21, %s22
          %p195 = scmp.lt.s32.totalorder %s194, 0
          %s196 = scalar_select %p195, %s194, 0
          %s197 = smul.u32 2, %s196
          %p198 = scmp.lt.s32.totalorder %s197, 1
          %s199 = scalar_select %p198, %s197, 1
          %s200 = smul.addr %s199, 2
          %s201 = scalar_lea.vmem %s2, %s200
          %s202 = sadd.s32 %s21, %s22
          %p203 = scmp.lt.s32.totalorder %s202, 0
          %s204 = scalar_select %p203, %s202, 0
          %s205 = smul.u32 2, %s204
        $region28: #{tpu_custom_call.1} parent=23 // pred_fallthru
          _
        // Predicated region
        $region29: #{tpu_custom_call.1} parent=23 // pred_check
          %p206 = pneg %p126
        $region30: #{tpu_custom_call.1} parent=23 // pred_check_branch
          %208 = sbr.rel (%p206) target = $region32
        $region31: #{tpu_custom_call.1} parent=23 // pred_region
          %s209 = sadd.s32 %s21, %s22
          %p210 = scmp.lt.s32.totalorder %s209, 0
          %s211 = scalar_select %p210, %s209, 0
          %s212 = smul.u32 2, %s211
          %p213 = scmp.lt.s32.totalorder %s212, 1
          %s214 = scalar_select %p213, %s212, 1
          %s215 = smul.addr %s214, 2
          %s216 = scalar_lea.vmem %s3, %s215
          %s217 = sadd.s32 %s21, %s22
          %p218 = scmp.lt.s32.totalorder %s217, 0
          %s219 = scalar_select %p218, %s217, 0
          %s220 = smul.u32 2, %s219
        $region32: #{tpu_custom_call.1} parent=23 // pred_fallthru
          _
      $region24: #{tpu_custom_call.1} parent=5 // pred_fallthru
        _
      %p221 = scmp.le.s32.totalorder 1, %s14
      %p222 = scmp.lt.s32.totalorder %s14, 3
      %p223 = pnand %p221, %p222
      %p224 = pneg %p223
      // Predicated region
      $region33: #{tpu_custom_call.1} parent=5 // pred_check
        _
      $region34: #{tpu_custom_call.1} parent=5 // pred_check_branch
        %226 = sbr.rel (%p223) target = $region36
      $region35: #{tpu_custom_call.1} parent=5 // pred_region
        %s227 = ssub.s32 %s14, 1
        // Predicated region
        $region37: #{tpu_custom_call.1} parent=35 // pred_check
          %p228 = pneg %p47
        $region38: #{tpu_custom_call.1} parent=35 // pred_check_branch
          %230 = sbr.rel (%p228) target = $region40
        $region39: #{tpu_custom_call.1} parent=35 // pred_region
          %231 = dma.done [#allocation4], 32
        $region40: #{tpu_custom_call.1} parent=35 // pred_fallthru
          _
        %p232 = pneg %p47
        %p233 = pneg %p44
        %p234 = pneg %p68
        %p235 = pneg %p65
        %s236 = sadd.s32 %s23, %s24
        %p237 = scmp.lt.s32.totalorder %s236, 0
        %s238 = scalar_select %p237, %s236, 0
        %s239 = smul.u32 2, %s238
        %p240 = scmp.lt.s32.totalorder %s239, 1
        %s241 = scalar_select %p240, %s239, 1
        %s242 = smul.addr %s241, 2
        %s243 = scalar_lea.vmem %s2, %s242
        %p244 = pneg %p100
        %p245 = pneg %p97
        %s246 = sadd.s32 %s23, %s24
        %p247 = scmp.lt.s32.totalorder %s246, 0
        %s248 = scalar_select %p247, %s246, 0
        %s249 = smul.u32 2, %s248
        %p250 = scmp.lt.s32.totalorder %s249, 1
        %s251 = scalar_select %p250, %s249, 1
        %s252 = smul.addr %s251, 2
        %s253 = scalar_lea.vmem %s3, %s252
        %p254 = pneg %p132
        %p255 = pneg %p129
        %p256 = pneg %p158
        %p257 = pneg %p155
        %s258 = sand.u32 %s145, 1
        %s259 = scalar_lea.sflag [#allocation5], %s258
        %s260 = sand.u32 %s145, 1
        %s261 = smul.addr %s260, 8
        %s262 = scalar_lea.vmem [#allocation6], %s261
        %s263 = sadd.s32 %s23, %s24
        %p264 = scmp.lt.s32.totalorder %s263, 0
        %s265 = scalar_select %p264, %s263, 0
        %s266 = smul.u32 2, %s265
        %p267 = scmp.lt.s32.totalorder %s266, 1
        %s268 = scalar_select %p267, %s266, 1
        %s269 = smul.addr %s268, 2
        %s270 = scalar_lea.vmem %s2, %s269
        %s271 = sadd.s32 %s23, %s24
        %p272 = scmp.lt.s32.totalorder %s271, 0
        %s273 = scalar_select %p272, %s271, 0
        %s274 = smul.u32 2, %s273
        %s275 = sadd.s32 %s23, %s24
        %p276 = scmp.lt.s32.totalorder %s275, 0
        %s277 = scalar_select %p276, %s275, 0
        %s278 = smul.u32 2, %s277
        %p279 = scmp.lt.s32.totalorder %s278, 1
        %s280 = scalar_select %p279, %s278, 1
        %s281 = smul.addr %s280, 2
        %s282 = scalar_lea.vmem %s3, %s281
        %s283 = sadd.s32 %s23, %s24
        %p284 = scmp.lt.s32.totalorder %s283, 0
        %s285 = scalar_select %p284, %s283, 0
        %s286 = smul.u32 2, %s285
        %p287 = scmp.eq.s32.totalorder %s24, 0
        // Predicated region
        $region41: #{tpu_custom_call.1} parent=35 // pred_check
          %p288 = pneg %p287
        $region42: #{tpu_custom_call.1} parent=35 // pred_check_branch
          %290 = sbr.rel (%p288) target = $region44
        $region43: #{tpu_custom_call.1} parent=35 // pred_region
          %vm291 = vcmask 0
          %292 = vst.msk [vmem:[#allocation2] sm:$0x1] %vm291, 0.0
        $region44: #{tpu_custom_call.1} parent=35 // pred_fallthru
          _
        %s293 = sadd.s32 %s23, %s24
        %s294 = smul.u32 %s293, 256
        %s295 = sadd.s32 %s294, 256
        %p296 = scmp.le.s32.totalorder %s295, 256
        // Predicated region
        $region45: #{tpu_custom_call.1} parent=35 // pred_check
          %p297 = pneg %p296
        $region46: #{tpu_custom_call.1} parent=35 // pred_check_branch
          %299 = sbr.rel (%p297) target = $region48
        $region47: #{tpu_custom_call.1} parent=35 // pred_region
          %v300 = vld [vmem:[%s270] sm:$0xf]
          %v301 = vld [vmem:[%s282] sm:$0xf]
          %v302 = vsub.f32 %v300, %v301
          %v303 = vand.u32 2147483647, %v302
          %v304 = vld [vmem:[#allocation2] sm:$0x1]
          %v307 = vunpack.c.l.s4 1983009808
          %v308 = vunpack.c.0.s8 %v307
          %v309 = vlaneseq
          %v310 = vshrl.u32 %v309, 7
          %v311 = vsub.s32 %v308, %v310
          %v312 = vrot.slane %v303, %v311
          %v313 = vcombine.high %v312, %v312
          %vm316 = vcmask 1041408
          %v317 = vsel %vm316, %v312, 0.0
          %v318 = vsel %vm316, %v313, 0.0
          %v319 = vadd.f32 %v317, %v318
          %320 = vadd.xlane.f32.xlu0 %v319
          %v321 = vpop.xlane.xlu0 %320
          %v322 = vrot.slane %v321, 4
          %v323 = vadd.f32 %v321, %v322
          %v324 = vrot.slane %v323, 2
          %v325 = vadd.f32 %v323, %v324
          %v326 = vrot.slane %v325, 1
          %v327 = vadd.f32 %v325, %v326
          %s328 = vtos %v327
          %v329 = vstv %s328
          %v330 = vadd.f32 %v304, %v329
          %vm331 = vcmask 0
          %332 = vst.msk [vmem:[#allocation2] sm:$0x1] %vm331, %v330
        $region48: #{tpu_custom_call.1} parent=35 // pred_fallthru
          _
        %p333 = scmp.gt.s32.totalorder %s295, 256
        // Predicated region
        $region49: #{tpu_custom_call.1} parent=35 // pred_check
          %p334 = pneg %p333
        $region50: #{tpu_custom_call.1} parent=35 // pred_check_branch
          %336 = sbr.rel (%p334) target = $region52
        $region51: #{tpu_custom_call.1} parent=35 // pred_region
          %v337 = vld [vmem:[%s270] sm:$0xf]
          %v338 = vld [vmem:[%s282] sm:$0xf]
          %v339 = vsub.f32 %v337, %v338
          %v340 = vand.u32 2147483647, %v339
          %v341 = vlaneseq
          %v342 = vand.u32 %v341, 127
          %v343 = vadd.s32 %v342, 128
          %v344 = vstv %s294
          %v345 = vadd.s32 %v344, %v342
          %v346 = vadd.s32 %v344, %v343
          %vm347 = vcmp.lt.s32.totalorder %v345, 256
          %vm348 = vcmp.lt.s32.totalorder %v346, 256
          %v351 = vunpack.c.l.s4 1983009808
          %v352 = vunpack.c.0.s8 %v351
          %v353 = vlaneseq
          %v354 = vshrl.u32 %v353, 7
          %v355 = vsub.s32 %v352, %v354
          %v356 = vrot.slane %v340, %v355
          %v357 = vcombine.high %v356, %v356
          %v360 = vsel %vm347, %v356, 0.0
          %v361 = vsel %vm348, %v357, 0.0
          %v362 = vld [vmem:[#allocation2] sm:$0x1]
          %vm363 = vcmask 1041408
          %v364 = vsel %vm363, %v360, 0.0
          %v365 = vsel %vm363, %v361, 0.0
          %v366 = vadd.f32 %v364, %v365
          %367 = vadd.xlane.f32.xlu0 %v366
          %v368 = vpop.xlane.xlu0 %367
          %v369 = vrot.slane %v368, 4
          %v370 = vadd.f32 %v368, %v369
          %v371 = vrot.slane %v370, 2
          %v372 = vadd.f32 %v370, %v371
          %v373 = vrot.slane %v372, 1
          %v374 = vadd.f32 %v372, %v373
          %s375 = vtos %v374
          %v376 = vstv %s375
          %v377 = vadd.f32 %v362, %v376
          %vm378 = vcmask 0
          %379 = vst.msk [vmem:[#allocation2] sm:$0x1] %vm378, %v377
        $region52: #{tpu_custom_call.1} parent=35 // pred_fallthru
          _
        // Predicated region
        $region53: #{tpu_custom_call.1} parent=35 // pred_check
          %p380 = pneg %p287
        $region54: #{tpu_custom_call.1} parent=35 // pred_check_branch
          %382 = sbr.rel (%p380) target = $region56
        $region55: #{tpu_custom_call.1} parent=35 // pred_region
          %v383 = vld [vmem:[#allocation2] sm:$0x1]
          %v384 = vld [vmem:[#allocation3] sm:$0x3]
          %vm385 = vcmask 25600
          %v386 = vsel %vm385, %v384, -inf
          %387 = vmax.xlane.f32.xlu0 %v386
          %v388 = vpop.xlane.xlu0 %387
          %v389 = vsub.f32 %v384, %v388
          %v390 = vmul.f32 %v389, 1.442695
          %v391 = vpow.pop %v390
          %v392 = vsel %vm385, %v391, 0.0
          %393 = vadd.xlane.f32.xlu0 %v392
          %v394 = vpop.xlane.xlu0 %393
          %v395 = vlog2.pop %v394
          %v396 = vmul.f32 %v395, 0.6931472
          %v397 = vadd.f32 %v396, %v388
          %v398 = vlaneseq
          %v399 = vand.u32 %v398, 127
          %v400 = vld [vmem:[%s1] sm:$0x3]
          %401 = vset.pattern.permute.xlu0 0
          %402 = vperm.xlu0 %401, %v400
          %v403 = vpop.permute.xlu0 %402
          %vm404 = vcmp.eq.s32.totalorder %v399, %v403
          %v405 = vsel %vm404, %v384, 0.0
          %v406 = vsel %vm385, %v405, 0.0
          %407 = vadd.xlane.f32.xlu0 %v406
          %v408 = vpop.xlane.xlu0 %407
          %v409 = vsub.f32 %v397, %v408
          %vm410 = vcmask 1024
          %v411 = vsel %vm410, %v409, 0.0
          %412 = vadd.xlane.f32.xlu0 %v411
          %v413 = vpop.xlane.xlu0 %412
          %v414 = vrot.slane %v413, 4
          %v415 = vadd.f32 %v413, %v414
          %v416 = vrot.slane %v415, 2
          %v417 = vadd.f32 %v415, %v416
          %v418 = vrot.slane %v417, 1
          %v419 = vadd.f32 %v417, %v418
          %s420 = vtos %v419
          %v421 = vstv %s420
          %p422 = scmp.eq.s32.totalorder %s23, 0
          %s423 = scalar_select %p422, 1, 0
          %v424 = vstv %s423
          %vm425 = vcmp.eq.s32.totalorder %v424, 1
          %v426 = vsel %vm425, %v421, 0.0
          %v427 = vlaneseq
          %v428 = vshrl.u32 %v427, 7
          %vm429 = vcmp.eq.s32.totalorder %v428, 0
          %vm430 = vcmp.eq.s32.totalorder %v399, 0
          %vm431 = vmand %vm429, %vm430
          %vm432 = vcmp.eq.s32.totalorder %v399, 1
          %vm433 = vmand %vm429, %vm432
          %v434 = vsel %vm433, %v426, 0.0
          %v436 = vlaneseq
          %v437 = vshrl.u32 %v436, 7
          %v438 = vsub.s32 0, %v437
          %v439 = vrot.slane %v383, %v438
          %440 = vset.pattern.permute.xlu0 0
          %441 = vperm.xlu0 %440, %v439
          %v442 = vpop.permute.xlu0 %441
          %v444 = vsel %vm431, %v442, %v434
          %445 = vst [vmem:[%s262] sm:$0xff] %v444
        $region56: #{tpu_custom_call.1} parent=35 // pred_fallthru
          _
        %s446 = sand.u32 %s145, 1
        %s447 = scalar_lea.sflag [#allocation5], %s446
        %s448 = sand.u32 %s145, 1
        %s449 = smul.addr %s448, 8
        %s450 = scalar_lea.vmem [#allocation6], %s449
        // Predicated region
        $region57: #{tpu_custom_call.1} parent=35 // pred_check
          %p451 = pneg %p155
        $region58: #{tpu_custom_call.1} parent=35 // pred_check_branch
          %453 = sbr.rel (%p451) target = $region60
        $region59: #{tpu_custom_call.1} parent=35 // pred_region
          %s455 = ssub.s32 128, 128
          %456 = vsyncadd %s447, %s455
          %s457 = smul.addr %s23, 128
          %s458 = scalar_lea.hbm %s4, %s457
          %s460 = sshll.u32 %s450, 4
          %s461 = int_to_ptr.vmem [resolvable:$true] %s460
          %463 = dma.vmem_to_hbm [thread:$0]  %s461, 128, %s458, %s447
        $region60: #{tpu_custom_call.1} parent=35 // pred_fallthru
          _
      $region36: #{tpu_custom_call.1} parent=5 // pred_fallthru
        _
      %p464 = scmp.le.s32.totalorder 2, %s14
      // Predicated region
      $region61: #{tpu_custom_call.1} parent=5 // pred_check
        %p465 = pneg %p464
      $region62: #{tpu_custom_call.1} parent=5 // pred_check_branch
        %467 = sbr.rel (%p465) target = $region64
      $region63: #{tpu_custom_call.1} parent=5 // pred_region
        %s468 = ssub.s32 %s14, 2
        // Predicated region
        $region65: #{tpu_custom_call.1} parent=63 // pred_check
          %p469 = pneg %p161
        $region66: #{tpu_custom_call.1} parent=63 // pred_check_branch
          %471 = sbr.rel (%p469) target = $region68
        $region67: #{tpu_custom_call.1} parent=63 // pred_region
          %s472 = sand.u32 %s146, 1
          %s473 = scalar_lea.sflag [#allocation5], %s472
          %s474 = sand.u32 %s146, 1
          %s475 = smul.addr %s474, 8
          %s476 = scalar_lea.vmem [#allocation6], %s475
          %477 = dma.done %s473, 128
        $region68: #{tpu_custom_call.1} parent=63 // pred_fallthru
          _
      $region64: #{tpu_custom_call.1} parent=5 // pred_fallthru
        _
    $region6: #{tpu_custom_call.1} parent=1 // loop_footer
      %s18 = sadd.s32 1, %s14
    $region7: #{tpu_custom_call.1} parent=1 // loop_footer_branch
      %13 = sbr.rel target = $region3
    $region8: #{tpu_custom_call.1} parent=1 // loop_exit
      _
    %478 = vsyncpa [#allocation4], 1
    %s479 = scalar_lea.sflag [#allocation4], 1
    %480 = vsyncpa %s479, 1
    %481 = vsyncpa [#allocation5], 1
    %s482 = scalar_lea.sflag [#allocation5], 1
    %483 = vsyncpa %s482, 1

</llo_original>
